<compile_context>
chip_gen: v6e
topology: v6e:2x2x1
jax: 0.10.0
libtpu: 0.0.40
codegen_flags: <defaults>
</compile_context>

<pallas_src>
import functools

import jax
import jax.numpy as jnp
from jax.experimental import pallas as pl
from jax.experimental.pallas import tpu as pltpu

GATE_NOT = 0
GATE_AND = 1

_LANE = 128                            # hardware lane width
_WIDTHS = (2048, 1024, 512, 256, 128)  # preferred slab widths (widest first)
_TARGET_BLOCK_ELEMS = 1 << 19          # ~512K elems per array per grid step
_DEFAULT_MIN_PALLAS_ELEMS = 1 << 15    # below this, plain jnp beats kernel launch


# ---------------- kernels (pure elementwise; one VPU op per element) --------

def _not_kernel(x_ref, o_ref):
    # Weakly-typed 1 keeps the computation in the input dtype (bf16 stays bf16).
    o_ref[...] = 1 - x_ref[...]


def _and_kernel(x1_ref, x2_ref, o_ref):
    o_ref[...] = x1_ref[...] * x2_ref[...]


def _nand_kernel(x1_ref, x2_ref, o_ref):
    # Fused NOT(AND(x1, x2)) in a single HBM pass.
    o_ref[...] = 1 - x1_ref[...] * x2_ref[...]


# ---------------- wrapper helpers -------------------------------------------

def _to_slab(x):
    """Flatten to a lane-dense (rows, W) slab. Avoids the jnp.pad copy whenever
    the element count is already a multiple of 128 (the common NN case)."""
    flat = x.reshape(-1)
    n = flat.shape[0]
    for w in _WIDTHS:
        if n % w == 0:
            return flat.reshape(n // w, w), n, False
    # Rare fallback: pad to a single lane multiple (costs one extra HBM pass).
    pad = (-n) % _LANE
    flat = jnp.pad(flat, (0, pad))
    return flat.reshape(-1, _LANE), n, True


def _pick_tile_rows(rows, width):
    """Rows per grid step: multiple of 8, sized so block ~= _TARGET_BLOCK_ELEMS
    elements per array (keeps double-buffered VMEM bounded, pipeline efficient)."""
    target = max(8, (_TARGET_BLOCK_ELEMS // width) // 8 * 8)
    if rows <= target:
        # Full-array block is always legal (even if rows % 8 != 0).
        return rows
    return target


def _launch(kernel, slabs, out_dtype):
    rows, width = slabs[0].shape
    tile_rows = _pick_tile_rows(rows, width)
    spec = pl.BlockSpec((tile_rows, width), lambda i: (i, 0))
    return pl.pallas_call(
        kernel,
        out_shape=jax.ShapeDtypeStruct((rows, width), out_dtype),
        grid=(pl.cdiv(rows, tile_rows),),
        in_specs=[spec] * len(slabs),
        out_specs=spec,
        compiler_params=pltpu.CompilerParams(
            dimension_semantics=("parallel",),
        ),
    )(*slabs)


@functools.partial(jax.jit, static_argnums=0)
def _elementwise(kernel, *xs):
    shape = xs[0].shape
    slabs = []
    n = None
    padded = False
    for x in xs:
        s, n, p = _to_slab(x)
        slabs.append(s)
        padded = padded or p
    out = _launch(kernel, slabs, slabs[0].dtype)
    if padded:
        out = out.reshape(-1)[:n]
    return out.reshape(shape)


def not_gate_pallas(x):
    return _elementwise(_not_kernel, x)


def and_gate_pallas(x1, x2):
    assert x1.shape == x2.shape, "AND gate expects same-shape inputs"
    return _elementwise(_and_kernel, x1, x2)


def nand_gate_pallas(x1, x2):
    """Fused NOT(AND(x1, x2)) — one HBM pass instead of two pallas_calls."""
    assert x1.shape == x2.shape, "NAND gate expects same-shape inputs"
    return _elementwise(_nand_kernel, x1, x2)


# ---------------- module-equivalent wrapper ----------------------------------

class LogicGate:
    """JAX/Pallas equivalent of the PyTorch LogicGate module.

    Tensors smaller than `min_pallas_elems` fall back to plain jnp since
    kernel-launch + grid-step overhead dwarfs the HBM traffic of tiny inputs.
    """

    def __init__(self, type: int, *,
                 min_pallas_elems: int = _DEFAULT_MIN_PALLAS_ELEMS) -> None:
        if type not in (GATE_NOT, GATE_AND):
            raise TypeError("undefined logic type id: %d" % type)
        self.type = type
        self.min_pallas_elems = min_pallas_elems

    def __call__(self, x1, x2=None):
        small = x1.size < self.min_pallas_elems
        if self.type == GATE_NOT:
            return (1 - x1) if small else not_gate_pallas(x1)
        else:  # GATE_AND
            return (x1 * x2) if small else and_gate_pallas(x1, x2)

    # TODO(synk): validate() in the PyTorch module is a host-side numpy range
    # check + print; it is not a kernel and is intentionally not translated.

    def __str__(self) -> str:
        name = "AND" if self.type == GATE_AND else "NOT"
        return "Logic Gate [%s]" % name


if __name__ == "__main__":
    key = jax.random.PRNGKey(0)
    k1, k2, k3, k4 = jax.random.split(key, 4)

    # Small demo shapes consistent with the module; force the Pallas path.
    x1 = jax.random.uniform(k1, (2, 4, 16, 16), dtype=jnp.float32)
    x2 = jax.random.uniform(k2, (2, 4, 16, 16), dtype=jnp.float32)

    not_gate = LogicGate(GATE_NOT, min_pallas_elems=0)
    and_gate = LogicGate(GATE_AND, min_pallas_elems=0)

    y_not = jax.block_until_ready(not_gate(x1))
    y_and = jax.block_until_ready(and_gate(x1, x2))
    assert y_not.shape == x1.shape and y_and.shape == x1.shape
    assert jnp.allclose(y_not, 1.0 - x1, atol=1e-6)
    assert jnp.allclose(y_and, x1 * x2, atol=1e-6)

    # bf16 NOT stays in bf16 (dtype-consistent constant, no f32 promotion).
    xb = jax.random.uniform(k3, (2, 4, 16, 16), dtype=jnp.float32).astype(jnp.bfloat16)
    yb = jax.block_until_ready(not_gate(xb))
    assert yb.dtype == jnp.bfloat16
    assert jnp.allclose(yb.astype(jnp.float32), (1 - xb).astype(jnp.float32), atol=1e-2)

    # Ragged element count exercises the (rare) padding fallback path.
    xr1 = jax.random.uniform(k4, (3, 5, 17, 13), dtype=jnp.float32)
    xr2 = jax.random.uniform(k1, (3, 5, 17, 13), dtype=jnp.float32)
    yr = jax.block_until_ready(and_gate(xr1, xr2))
    assert jnp.allclose(yr, xr1 * xr2, atol=1e-6)

    # Larger tensor exercises the row-tiled multi-step grid path.
    xl1 = jax.random.uniform(k2, (8, 16, 128, 128), dtype=jnp.float32)
    xl2 = jax.random.uniform(k3, (8, 16, 128, 128), dtype=jnp.float32)
    yl = jax.block_until_ready(and_gate(xl1, xl2))
    assert jnp.allclose(yl, xl1 * xl2, atol=1e-6)

    # Fused NAND: NOT(AND(.,.)) chain in a single HBM pass.
    yn = jax.block_until_ready(nand_gate_pallas(x1, x2))
    assert jnp.allclose(yn, 1.0 - x1 * x2, atol=1e-6)

    print("KERNEL_OK")
</pallas_src>

<mosaic_0001>
module attributes {stable_mosaic.version = 11 : i64} {
  func.func @_not_kernel(%arg0: i32, %arg1: memref<1x2048xf32, #tpu.memory_space<vmem>>, %arg2: memref<1x2048xf32, #tpu.memory_space<vmem>>) attributes {dimension_semantics = [#tpu.dimension_semantics<parallel>], iteration_bounds = array<i64: 1>, scalar_prefetch = 0 : i64, scratch_operands = 0 : i64, tpu.core_type = #tpu.core_type<tc>, window_params = [{transform_indices = @transform_0, window_bounds = array<i64: 1, 2048>}, {transform_indices = @transform_1, window_bounds = array<i64: 1, 2048>}]} {
    %c0 = arith.constant 0 : index
    %c0_0 = arith.constant 0 : index
    %0 = vector.load %arg1[%c0, %c0_0] : memref<1x2048xf32, #tpu.memory_space<vmem>>, vector<1x2048xf32>
    %cst = arith.constant 1.000000e+00 : f32
    %1 = vector.broadcast %cst : f32 to vector<1x2048xf32>
    %2 = arith.subf %1, %0 : vector<1x2048xf32>
    %c0_1 = arith.constant 0 : index
    %c0_2 = arith.constant 0 : index
    %3 = vector.load %arg2[%c0_1, %c0_2] : memref<1x2048xf32, #tpu.memory_space<vmem>>, vector<1x2048xf32>
    tpu.vector_store %arg2[%c0_1, %c0_2], %2 {strides = array<i32>} : memref<1x2048xf32, #tpu.memory_space<vmem>>, vector<1x2048xf32>,
    return
  }
  func.func @transform_0(%arg0: i32) -> (i32, i32) {
    %c0_i32 = arith.constant 0 : i32
    %c0_i32_0 = arith.constant 0 : i32
    return %arg0, %c0_i32 : i32, i32
  }
  func.func @transform_1(%arg0: i32) -> (i32, i32) {
    %c0_i32 = arith.constant 0 : i32
    %c0_i32_0 = arith.constant 0 : i32
    return %arg0, %c0_i32 : i32, i32
  }
}

</mosaic_0001>

<llo_original>
// kernel: _elementwise.1
$region0: #{_elementwise.1}
  #allocation0 [shape = 'u32[]', space=smem, size = 0x4, offset = 0x4, fixed_abs, tag = 'smem constant byte address 0x4 - core index']
  #allocation1 [shape = 'u32[144,128]{1,0:T(1,128)}', space=vmem, size = 0x12000, scoped, tag = 'internal scratch']
  %s0 = inlined_call_operand.vmem [shape: f32[1,2048], index: 0, kind: input, shape index: {}]
  %s1 = inlined_call_operand.vmem [shape: f32[1,2048], index: 1, kind: output, shape index: {}]
  %s2 = sld [smem:[#allocation0]]
  $region14: #{_elementwise.1} parent=0
    _
  %s4 = ssub.s32 1, %s2
  %s5 = scalar_select 0, %s4, %s2
  // Predicated region
  $region2: #{_elementwise.1} parent=0 // pred_check
    _
  $region3: #{_elementwise.1} parent=0 // pred_check_branch
    %7 = sbr.rel (0) target = $region5
  $region4: #{_elementwise.1} parent=0 // pred_region
    _
  $region5: #{_elementwise.1} parent=0 // pred_fallthru
    _
  %v8 = vld [vmem:[%s0] sm:$0xff]
  %v9 = vld [vmem:[%s0 + $0x8] sm:$0xff]
  %v10 = vsub.f32 1.0, %v8
  %v11 = vsub.f32 1.0, %v9
  %12 = vst [vmem:[%s1] sm:$0xff] %v10
  %13 = vst [vmem:[%s1 + $0x8] sm:$0xff] %v11
  // Predicated region
  $region6: #{_elementwise.1} parent=0 // pred_check
    _
  $region7: #{_elementwise.1} parent=0 // pred_check_branch
    %15 = sbr.rel (0) target = $region9
  $region8: #{_elementwise.1} parent=0 // pred_region
    _
  $region9: #{_elementwise.1} parent=0 // pred_fallthru
    _
  // Predicated region
  $region10: #{_elementwise.1} parent=0 // pred_check
    _
  $region11: #{_elementwise.1} parent=0 // pred_check_branch
    %17 = sbr.rel (0) target = $region13
  $region12: #{_elementwise.1} parent=0 // pred_region
    _
  $region13: #{_elementwise.1} parent=0 // pred_fallthru
    _

</llo_original>
